<compile_context>
chip_gen: v7x
topology: tpu7x:2x2x1
jax: 0.10.0
libtpu: 0.0.40
codegen_flags: <defaults>
</compile_context>

<pallas_src>
import jax
import jax.numpy as jnp
from jax.experimental import pallas as pl
from jax.experimental.pallas import tpu as pltpu

LANE = 128
SUBLANE = 8
MAX_BLOCK_ROWS = 2048   # 2048 * 128 * 4B = 1 MiB per input stream per buffer
SMOOTH = 1.0            # matches PyTorch default `smooth=1`


def _fuzzy_iou_kernel(n_ref, x_ref, t_ref, o_ref,
                      inter_raw, union_raw, inter_sig, union_sig, tmax):
    step = pl.program_id(0)
    nsteps = pl.num_programs(0)

    @pl.when(step == 0)
    def _init():
        inter_raw[...] = jnp.zeros_like(inter_raw)
        union_raw[...] = jnp.zeros_like(union_raw)
        inter_sig[...] = jnp.zeros_like(inter_sig)
        union_sig[...] = jnp.zeros_like(union_sig)
        tmax[...] = jnp.full_like(tmax, -jnp.inf)

    x = x_ref[...].astype(jnp.float32)
    t = t_ref[...].astype(jnp.float32)
    block_rows = x.shape[0]            # static (block shape)
    block_elems = block_rows * LANE    # static

    def accum(valid):
        # Raw branch (used when targets.max() <= 1).
        iv = x * t
        uv = x + t - iv
        # Sigmoid branch (used when targets.max() > 1).
        xs = jax.nn.sigmoid(x)
        ts = jax.nn.sigmoid(t)
        ivs = xs * ts
        uvs = xs + ts - ivs
        if valid is None:
            tmv = t
        else:
            # Select (not multiply) so garbage/pad values (possibly NaN/Inf in
            # a partial last block) never reach the accumulators.
            iv = jnp.where(valid, iv, 0.0)
            uv = jnp.where(valid, uv, 0.0)
            ivs = jnp.where(valid, ivs, 0.0)
            uvs = jnp.where(valid, uvs, 0.0)
            tmv = jnp.where(valid, t, -jnp.inf)
        # Fold (block_rows, 128) -> (8, 128) with elementwise (VPU) adds/maxes.
        inter_raw[...] += jnp.sum(iv.reshape(-1, SUBLANE, LANE), axis=0)
        union_raw[...] += jnp.sum(uv.reshape(-1, SUBLANE, LANE), axis=0)
        inter_sig[...] += jnp.sum(ivs.reshape(-1, SUBLANE, LANE), axis=0)
        union_sig[...] += jnp.sum(uvs.reshape(-1, SUBLANE, LANE), axis=0)
        tmax[...] = jnp.maximum(
            tmax[...], jnp.max(tmv.reshape(-1, SUBLANE, LANE), axis=0))

    @pl.when(step < nsteps - 1)
    def _body_full():
        accum(None)   # interior blocks: no masking needed

    @pl.when(step == nsteps - 1)
    def _body_tail_and_finalize():
        n = n_ref[0]
        row = jax.lax.broadcasted_iota(jnp.int32, (block_rows, LANE), 0)
        lane = jax.lax.broadcasted_iota(jnp.int32, (block_rows, LANE), 1)
        idx = step * block_elems + row * LANE + lane
        accum(idx < n)

        # Finalize: single cross-lane/sublane reduction + branch select.
        use_sig = jnp.max(tmax[...]) > 1.0
        inter = jnp.where(use_sig, jnp.sum(inter_sig[...]),
                          jnp.sum(inter_raw[...]))
        union = jnp.where(use_sig, jnp.sum(union_sig[...]),
                          jnp.sum(union_raw[...]))
        iou = (inter + SMOOTH) / (union + SMOOTH)
        o_ref[...] = jnp.reshape(1.0 - iou, (1, 1)).astype(o_ref.dtype)


def fuzzy_iou_loss(inputs, targets, *, max_block_rows=MAX_BLOCK_ROWS):
    """Pallas TPU implementation of FuzzyIoULoss.forward (smooth=1)."""
    x = inputs.reshape(-1)
    t = targets.reshape(-1)
    n = x.shape[0]

    # Pad only if the flat length is not lane-aligned (pad < 128 elements);
    # padded values are masked out in-kernel using the true count n.
    rem = n % LANE
    if rem != 0:
        pad = LANE - rem
        x = jnp.pad(x, (0, pad))
        t = jnp.pad(t, (0, pad))
    rows = x.shape[0] // LANE

    max_block_rows = max(SUBLANE, (max_block_rows // SUBLANE) * SUBLANE)
    block_rows = min(max_block_rows, ((rows + SUBLANE - 1) // SUBLANE) * SUBLANE)
    grid = (pl.cdiv(rows, block_rows),)

    x2 = x.reshape(rows, LANE)
    t2 = t.reshape(rows, LANE)
    n_arr = jnp.array([n], dtype=jnp.int32)

    out = pl.pallas_call(
        _fuzzy_iou_kernel,
        out_shape=jax.ShapeDtypeStruct((1, 1), jnp.float32),
        grid_spec=pltpu.PrefetchScalarGridSpec(
            num_scalar_prefetch=1,
            grid=grid,
            in_specs=[
                pl.BlockSpec((block_rows, LANE), lambda i, n_ref: (i, 0)),
                pl.BlockSpec((block_rows, LANE), lambda i, n_ref: (i, 0)),
            ],
            out_specs=pl.BlockSpec((1, 1), lambda i, n_ref: (0, 0)),
            scratch_shapes=[pltpu.VMEM((SUBLANE, LANE), jnp.float32)] * 5,
        ),
        compiler_params=pltpu.CompilerParams(
            dimension_semantics=("arbitrary",)),
    )(n_arr, x2, t2)
    return out[0, 0]


def _reference(inputs, targets, smooth=1.0):
    x = inputs.reshape(-1).astype(jnp.float32)
    t = targets.reshape(-1).astype(jnp.float32)
    use_sig = jnp.max(t) > 1.0
    xs = jnp.where(use_sig, jax.nn.sigmoid(x), x)
    ts = jnp.where(use_sig, jax.nn.sigmoid(t), t)
    iv = xs * ts
    union = jnp.sum(xs + ts - iv)
    inter = jnp.sum(iv)
    return 1.0 - (inter + smooth) / (union + smooth)


if __name__ == "__main__":
    key = jax.random.PRNGKey(0)
    k1, k2 = jax.random.split(key)

    # Binary-segmentation style inputs: predictions in [0,1], binary targets.
    shape = (2, 1, 32, 32)  # NCHW
    inputs = jax.random.uniform(k1, shape, dtype=jnp.float32)
    targets = (jax.random.uniform(k2, shape) > 0.5).astype(jnp.float32)

    loss = fuzzy_iou_loss(inputs, targets)
    jax.block_until_ready(loss)
    ref = _reference(inputs, targets)
    assert jnp.allclose(loss, ref, atol=1e-5, rtol=1e-5), (loss, ref)

    # Sigmoid branch (targets.max() > 1).
    targets2 = targets * 3.0
    loss2 = fuzzy_iou_loss(inputs, targets2)
    jax.block_until_ready(loss2)
    ref2 = _reference(inputs, targets2)
    assert jnp.allclose(loss2, ref2, atol=1e-5, rtol=1e-5), (loss2, ref2)

    # Ragged size (not a multiple of 128) -> exercises in-kernel tail mask.
    k3, k4 = jax.random.split(k1)
    shape3 = (2, 3, 7, 11)
    inputs3 = jax.random.normal(k3, shape3, dtype=jnp.float32)
    targets3 = (jax.random.uniform(k4, shape3) > 0.5).astype(jnp.float32)
    loss3 = fuzzy_iou_loss(inputs3, targets3)
    jax.block_until_ready(loss3)
    ref3 = _reference(inputs3, targets3)
    assert jnp.allclose(loss3, ref3, atol=1e-5, rtol=1e-5), (loss3, ref3)
    loss3b = fuzzy_iou_loss(inputs3, targets3 * 5.0)
    jax.block_until_ready(loss3b)
    ref3b = _reference(inputs3, targets3 * 5.0)
    assert jnp.allclose(loss3b, ref3b, atol=1e-5, rtol=1e-5), (loss3b, ref3b)

    # Multi-grid-step path (small block to force several accumulation steps).
    shape4 = (2, 4, 32, 32)
    inputs4 = jax.random.normal(k3, shape4, dtype=jnp.float32)
    targets4 = (jax.random.uniform(k4, shape4) > 0.5).astype(jnp.float32)
    loss4 = fuzzy_iou_loss(inputs4, targets4, max_block_rows=16)
    jax.block_until_ready(loss4)
    ref4 = _reference(inputs4, targets4)
    assert jnp.allclose(loss4, ref4, atol=1e-5, rtol=1e-5), (loss4, ref4)

    print("KERNEL_OK")
</pallas_src>

<mosaic_0001>
module attributes {stable_mosaic.version = 11 : i64} {
  func.func @_fuzzy_iou_kernel(%arg0: i32, %arg1: memref<1xi32, #tpu.memory_space<smem>>, %arg2: memref<16x128xf32, #tpu.memory_space<vmem>>, %arg3: memref<16x128xf32, #tpu.memory_space<vmem>>, %arg4: memref<1x1xf32, #tpu.memory_space<vmem>>, %arg5: memref<8x128xf32, #tpu.memory_space<vmem>>, %arg6: memref<8x128xf32, #tpu.memory_space<vmem>>, %arg7: memref<8x128xf32, #tpu.memory_space<vmem>>, %arg8: memref<8x128xf32, #tpu.memory_space<vmem>>, %arg9: memref<8x128xf32, #tpu.memory_space<vmem>>) attributes {dimension_semantics = [#tpu.dimension_semantics<arbitrary>], iteration_bounds = array<i64: 1>, scalar_prefetch = 1 : i64, scratch_operands = 5 : i64, tpu.core_type = #tpu.core_type<tc>, window_params = [{transform_indices = @transform_0, window_bounds = array<i64: 16, 128>}, {transform_indices = @transform_1, window_bounds = array<i64: 16, 128>}, {pipeline_mode = #tpu.pipeline_mode<synchronous>, transform_indices = @transform_2, window_bounds = array<i64: 1, 1>}]} {
    %c0_i32 = arith.constant 0 : i32
    %0 = arith.cmpi eq, %arg0, %c0_i32 : i32
    %1 = arith.extui %0 : i1 to i32
    %c0_i32_0 = arith.constant 0 : i32
    %2 = arith.cmpi ne, %1, %c0_i32_0 : i32
    scf.if %2 {
      %cst = arith.constant 0.000000e+00 : f32
      %11 = vector.broadcast %cst : f32 to vector<8x128xf32>
      %c0_8 = arith.constant 0 : index
      %c0_9 = arith.constant 0 : index
      %12 = vector.load %arg5[%c0_8, %c0_9] : memref<8x128xf32, #tpu.memory_space<vmem>>, vector<8x128xf32>
      tpu.vector_store %arg5[%c0_8, %c0_9], %11 {strides = array<i32>} : memref<8x128xf32, #tpu.memory_space<vmem>>, vector<8x128xf32>,
      %cst_10 = arith.constant 0.000000e+00 : f32
      %13 = vector.broadcast %cst_10 : f32 to vector<8x128xf32>
      %c0_11 = arith.constant 0 : index
      %c0_12 = arith.constant 0 : index
      %14 = vector.load %arg6[%c0_11, %c0_12] : memref<8x128xf32, #tpu.memory_space<vmem>>, vector<8x128xf32>
      tpu.vector_store %arg6[%c0_11, %c0_12], %13 {strides = array<i32>} : memref<8x128xf32, #tpu.memory_space<vmem>>, vector<8x128xf32>,
      %cst_13 = arith.constant 0.000000e+00 : f32
      %15 = vector.broadcast %cst_13 : f32 to vector<8x128xf32>
      %c0_14 = arith.constant 0 : index
      %c0_15 = arith.constant 0 : index
      %16 = vector.load %arg7[%c0_14, %c0_15] : memref<8x128xf32, #tpu.memory_space<vmem>>, vector<8x128xf32>
      tpu.vector_store %arg7[%c0_14, %c0_15], %15 {strides = array<i32>} : memref<8x128xf32, #tpu.memory_space<vmem>>, vector<8x128xf32>,
      %cst_16 = arith.constant 0.000000e+00 : f32
      %17 = vector.broadcast %cst_16 : f32 to vector<8x128xf32>
      %c0_17 = arith.constant 0 : index
      %c0_18 = arith.constant 0 : index
      %18 = vector.load %arg8[%c0_17, %c0_18] : memref<8x128xf32, #tpu.memory_space<vmem>>, vector<8x128xf32>
      tpu.vector_store %arg8[%c0_17, %c0_18], %17 {strides = array<i32>} : memref<8x128xf32, #tpu.memory_space<vmem>>, vector<8x128xf32>,
      %cst_19 = arith.constant 0xFF800000 : f32
      %19 = vector.broadcast %cst_19 : f32 to vector<8x128xf32>
      %c0_20 = arith.constant 0 : index
      %c0_21 = arith.constant 0 : index
      %20 = vector.load %arg9[%c0_20, %c0_21] : memref<8x128xf32, #tpu.memory_space<vmem>>, vector<8x128xf32>
      tpu.vector_store %arg9[%c0_20, %c0_21], %19 {strides = array<i32>} : memref<8x128xf32, #tpu.memory_space<vmem>>, vector<8x128xf32>,
    } else {
    }
    %c0 = arith.constant 0 : index
    %c0_1 = arith.constant 0 : index
    %3 = vector.load %arg2[%c0, %c0_1] : memref<16x128xf32, #tpu.memory_space<vmem>>, vector<16x128xf32>
    %c0_2 = arith.constant 0 : index
    %c0_3 = arith.constant 0 : index
    %4 = vector.load %arg3[%c0_2, %c0_3] : memref<16x128xf32, #tpu.memory_space<vmem>>, vector<16x128xf32>
    %c0_i32_4 = arith.constant 0 : i32
    %5 = arith.cmpi slt, %arg0, %c0_i32_4 : i32
    %6 = arith.extui %5 : i1 to i32
    %c0_i32_5 = arith.constant 0 : i32
    %7 = arith.cmpi ne, %6, %c0_i32_5 : i32
    scf.if %7 {
      %11 = arith.mulf %3, %4 : vector<16x128xf32>
      %12 = arith.addf %3, %4 : vector<16x128xf32>
      %13 = arith.subf %12, %11 : vector<16x128xf32>
      %14 = arith.negf %3 : vector<16x128xf32>
      %15 = math.exp %14 : vector<16x128xf32>
      %cst = arith.constant 1.000000e+00 : f32
      %16 = vector.broadcast %cst : f32 to vector<16x128xf32>
      %17 = arith.addf %16, %15 : vector<16x128xf32>
      %18 = arith.divf %16, %17 : vector<16x128xf32>
      %19 = arith.negf %4 : vector<16x128xf32>
      %20 = math.exp %19 : vector<16x128xf32>
      %cst_8 = arith.constant 1.000000e+00 : f32
      %21 = vector.broadcast %cst_8 : f32 to vector<16x128xf32>
      %22 = arith.addf %21, %20 : vector<16x128xf32>
      %23 = arith.divf %21, %22 : vector<16x128xf32>
      %24 = arith.mulf %18, %23 : vector<16x128xf32>
      %25 = arith.addf %18, %23 : vector<16x128xf32>
      %26 = arith.subf %25, %24 : vector<16x128xf32>
      %c0_9 = arith.constant 0 : index
      %c0_10 = arith.constant 0 : index
      %27 = vector.load %arg5[%c0_9, %c0_10] : memref<8x128xf32, #tpu.memory_space<vmem>>, vector<8x128xf32>
      %28 = vector.shape_cast %11 : vector<16x128xf32> to vector<2x8x128xf32>
      %cst_11 = arith.constant dense<0.000000e+00> : vector<8x128xf32>
      %29 = vector.multi_reduction <add>, %28, %cst_11 [0] : vector<2x8x128xf32> to vector<8x128xf32>
      %30 = arith.addf %27, %29 : vector<8x128xf32>
      %c0_12 = arith.constant 0 : index
      %c0_13 = arith.constant 0 : index
      %31 = vector.load %arg5[%c0_12, %c0_13] : memref<8x128xf32, #tpu.memory_space<vmem>>, vector<8x128xf32>
      tpu.vector_store %arg5[%c0_12, %c0_13], %30 {strides = array<i32>} : memref<8x128xf32, #tpu.memory_space<vmem>>, vector<8x128xf32>,
      %c0_14 = arith.constant 0 : index
      %c0_15 = arith.constant 0 : index
      %32 = vector.load %arg6[%c0_14, %c0_15] : memref<8x128xf32, #tpu.memory_space<vmem>>, vector<8x128xf32>
      %33 = vector.shape_cast %13 : vector<16x128xf32> to vector<2x8x128xf32>
      %cst_16 = arith.constant dense<0.000000e+00> : vector<8x128xf32>
      %34 = vector.multi_reduction <add>, %33, %cst_16 [0] : vector<2x8x128xf32> to vector<8x128xf32>
      %35 = arith.addf %32, %34 : vector<8x128xf32>
      %c0_17 = arith.constant 0 : index
      %c0_18 = arith.constant 0 : index
      %36 = vector.load %arg6[%c0_17, %c0_18] : memref<8x128xf32, #tpu.memory_space<vmem>>, vector<8x128xf32>
      tpu.vector_store %arg6[%c0_17, %c0_18], %35 {strides = array<i32>} : memref<8x128xf32, #tpu.memory_space<vmem>>, vector<8x128xf32>,
      %c0_19 = arith.constant 0 : index
      %c0_20 = arith.constant 0 : index
      %37 = vector.load %arg7[%c0_19, %c0_20] : memref<8x128xf32, #tpu.memory_space<vmem>>, vector<8x128xf32>
      %38 = vector.shape_cast %24 : vector<16x128xf32> to vector<2x8x128xf32>
      %cst_21 = arith.constant dense<0.000000e+00> : vector<8x128xf32>
      %39 = vector.multi_reduction <add>, %38, %cst_21 [0] : vector<2x8x128xf32> to vector<8x128xf32>
      %40 = arith.addf %37, %39 : vector<8x128xf32>
      %c0_22 = arith.constant 0 : index
      %c0_23 = arith.constant 0 : index
      %41 = vector.load %arg7[%c0_22, %c0_23] : memref<8x128xf32, #tpu.memory_space<vmem>>, vector<8x128xf32>
      tpu.vector_store %arg7[%c0_22, %c0_23], %40 {strides = array<i32>} : memref<8x128xf32, #tpu.memory_space<vmem>>, vector<8x128xf32>,
      %c0_24 = arith.constant 0 : index
      %c0_25 = arith.constant 0 : index
      %42 = vector.load %arg8[%c0_24, %c0_25] : memref<8x128xf32, #tpu.memory_space<vmem>>, vector<8x128xf32>
      %43 = vector.shape_cast %26 : vector<16x128xf32> to vector<2x8x128xf32>
      %cst_26 = arith.constant dense<0.000000e+00> : vector<8x128xf32>
      %44 = vector.multi_reduction <add>, %43, %cst_26 [0] : vector<2x8x128xf32> to vector<8x128xf32>
      %45 = arith.addf %42, %44 : vector<8x128xf32>
      %c0_27 = arith.constant 0 : index
      %c0_28 = arith.constant 0 : index
      %46 = vector.load %arg8[%c0_27, %c0_28] : memref<8x128xf32, #tpu.memory_space<vmem>>, vector<8x128xf32>
      tpu.vector_store %arg8[%c0_27, %c0_28], %45 {strides = array<i32>} : memref<8x128xf32, #tpu.memory_space<vmem>>, vector<8x128xf32>,
      %c0_29 = arith.constant 0 : index
      %c0_30 = arith.constant 0 : index
      %47 = vector.load %arg9[%c0_29, %c0_30] : memref<8x128xf32, #tpu.memory_space<vmem>>, vector<8x128xf32>
      %48 = vector.shape_cast %4 : vector<16x128xf32> to vector<2x8x128xf32>
      %cst_31 = arith.constant dense<0xFF800000> : vector<8x128xf32>
      %49 = vector.multi_reduction <maximumf>, %48, %cst_31 [0] : vector<2x8x128xf32> to vector<8x128xf32>
      %50 = arith.maximumf %47, %49 : vector<8x128xf32>
      %c0_32 = arith.constant 0 : index
      %c0_33 = arith.constant 0 : index
      %51 = vector.load %arg9[%c0_32, %c0_33] : memref<8x128xf32, #tpu.memory_space<vmem>>, vector<8x128xf32>
      tpu.vector_store %arg9[%c0_32, %c0_33], %50 {strides = array<i32>} : memref<8x128xf32, #tpu.memory_space<vmem>>, vector<8x128xf32>,
    } else {
    }
    %c0_i32_6 = arith.constant 0 : i32
    %8 = arith.cmpi eq, %arg0, %c0_i32_6 : i32
    %9 = arith.extui %8 : i1 to i32
    %c0_i32_7 = arith.constant 0 : i32
    %10 = arith.cmpi ne, %9, %c0_i32_7 : i32
    scf.if %10 {
      %c0_8 = arith.constant 0 : index
      %11 = memref.load %arg1[%c0_8] : memref<1xi32, #tpu.memory_space<smem>>
      %12 = tpu.iota {dimensions = array<i32: 0>} : vector<16x128xi32>
      %13 = tpu.iota {dimensions = array<i32: 1>} : vector<16x128xi32>
      %c2048_i32 = arith.constant 2048 : i32
      %14 = arith.muli %arg0, %c2048_i32 : i32
      %c128_i32 = arith.constant 128 : i32
      %15 = vector.broadcast %c128_i32 : i32 to vector<16x128xi32>
      %16 = arith.muli %12, %15 : vector<16x128xi32>
      %17 = vector.broadcast %14 : i32 to vector<16x128xi32>
      %18 = arith.addi %17, %16 : vector<16x128xi32>
      %19 = arith.addi %18, %13 : vector<16x128xi32>
      %20 = vector.broadcast %11 : i32 to vector<16x128xi32>
      %21 = arith.cmpi slt, %19, %20 : vector<16x128xi32>
      %22 = arith.mulf %3, %4 : vector<16x128xf32>
      %23 = arith.addf %3, %4 : vector<16x128xf32>
      %24 = arith.subf %23, %22 : vector<16x128xf32>
      %25 = arith.negf %3 : vector<16x128xf32>
      %26 = math.exp %25 : vector<16x128xf32>
      %cst = arith.constant 1.000000e+00 : f32
      %27 = vector.broadcast %cst : f32 to vector<16x128xf32>
      %28 = arith.addf %27, %26 : vector<16x128xf32>
      %29 = arith.divf %27, %28 : vector<16x128xf32>
      %30 = arith.negf %4 : vector<16x128xf32>
      %31 = math.exp %30 : vector<16x128xf32>
      %cst_9 = arith.constant 1.000000e+00 : f32
      %32 = vector.broadcast %cst_9 : f32 to vector<16x128xf32>
      %33 = arith.addf %32, %31 : vector<16x128xf32>
      %34 = arith.divf %32, %33 : vector<16x128xf32>
      %35 = arith.mulf %29, %34 : vector<16x128xf32>
      %36 = arith.addf %29, %34 : vector<16x128xf32>
      %37 = arith.subf %36, %35 : vector<16x128xf32>
      %cst_10 = arith.constant 0.000000e+00 : f32
      %38 = vector.broadcast %cst_10 : f32 to vector<16x128xf32>
      %39 = arith.select %21, %22, %38 : vector<16x128xi1>, vector<16x128xf32>
      %cst_11 = arith.constant 0.000000e+00 : f32
      %40 = vector.broadcast %cst_11 : f32 to vector<16x128xf32>
      %41 = arith.select %21, %24, %40 : vector<16x128xi1>, vector<16x128xf32>
      %cst_12 = arith.constant 0.000000e+00 : f32
      %42 = vector.broadcast %cst_12 : f32 to vector<16x128xf32>
      %43 = arith.select %21, %35, %42 : vector<16x128xi1>, vector<16x128xf32>
      %cst_13 = arith.constant 0.000000e+00 : f32
      %44 = vector.broadcast %cst_13 : f32 to vector<16x128xf32>
      %45 = arith.select %21, %37, %44 : vector<16x128xi1>, vector<16x128xf32>
      %cst_14 = arith.constant 0xFF800000 : f32
      %46 = vector.broadcast %cst_14 : f32 to vector<16x128xf32>
      %47 = arith.select %21, %4, %46 : vector<16x128xi1>, vector<16x128xf32>
      %c0_15 = arith.constant 0 : index
      %c0_16 = arith.constant 0 : index
      %48 = vector.load %arg5[%c0_15, %c0_16] : memref<8x128xf32, #tpu.memory_space<vmem>>, vector<8x128xf32>
      %49 = vector.shape_cast %39 : vector<16x128xf32> to vector<2x8x128xf32>
      %cst_17 = arith.constant dense<0.000000e+00> : vector<8x128xf32>
      %50 = vector.multi_reduction <add>, %49, %cst_17 [0] : vector<2x8x128xf32> to vector<8x128xf32>
      %51 = arith.addf %48, %50 : vector<8x128xf32>
      %c0_18 = arith.constant 0 : index
      %c0_19 = arith.constant 0 : index
      %52 = vector.load %arg5[%c0_18, %c0_19] : memref<8x128xf32, #tpu.memory_space<vmem>>, vector<8x128xf32>
      tpu.vector_store %arg5[%c0_18, %c0_19], %51 {strides = array<i32>} : memref<8x128xf32, #tpu.memory_space<vmem>>, vector<8x128xf32>,
      %c0_20 = arith.constant 0 : index
      %c0_21 = arith.constant 0 : index
      %53 = vector.load %arg6[%c0_20, %c0_21] : memref<8x128xf32, #tpu.memory_space<vmem>>, vector<8x128xf32>
      %54 = vector.shape_cast %41 : vector<16x128xf32> to vector<2x8x128xf32>
      %cst_22 = arith.constant dense<0.000000e+00> : vector<8x128xf32>
      %55 = vector.multi_reduction <add>, %54, %cst_22 [0] : vector<2x8x128xf32> to vector<8x128xf32>
      %56 = arith.addf %53, %55 : vector<8x128xf32>
      %c0_23 = arith.constant 0 : index
      %c0_24 = arith.constant 0 : index
      %57 = vector.load %arg6[%c0_23, %c0_24] : memref<8x128xf32, #tpu.memory_space<vmem>>, vector<8x128xf32>
      tpu.vector_store %arg6[%c0_23, %c0_24], %56 {strides = array<i32>} : memref<8x128xf32, #tpu.memory_space<vmem>>, vector<8x128xf32>,
      %c0_25 = arith.constant 0 : index
      %c0_26 = arith.constant 0 : index
      %58 = vector.load %arg7[%c0_25, %c0_26] : memref<8x128xf32, #tpu.memory_space<vmem>>, vector<8x128xf32>
      %59 = vector.shape_cast %43 : vector<16x128xf32> to vector<2x8x128xf32>
      %cst_27 = arith.constant dense<0.000000e+00> : vector<8x128xf32>
      %60 = vector.multi_reduction <add>, %59, %cst_27 [0] : vector<2x8x128xf32> to vector<8x128xf32>
      %61 = arith.addf %58, %60 : vector<8x128xf32>
      %c0_28 = arith.constant 0 : index
      %c0_29 = arith.constant 0 : index
      %62 = vector.load %arg7[%c0_28, %c0_29] : memref<8x128xf32, #tpu.memory_space<vmem>>, vector<8x128xf32>
      tpu.vector_store %arg7[%c0_28, %c0_29], %61 {strides = array<i32>} : memref<8x128xf32, #tpu.memory_space<vmem>>, vector<8x128xf32>,
      %c0_30 = arith.constant 0 : index
      %c0_31 = arith.constant 0 : index
      %63 = vector.load %arg8[%c0_30, %c0_31] : memref<8x128xf32, #tpu.memory_space<vmem>>, vector<8x128xf32>
      %64 = vector.shape_cast %45 : vector<16x128xf32> to vector<2x8x128xf32>
      %cst_32 = arith.constant dense<0.000000e+00> : vector<8x128xf32>
      %65 = vector.multi_reduction <add>, %64, %cst_32 [0] : vector<2x8x128xf32> to vector<8x128xf32>
      %66 = arith.addf %63, %65 : vector<8x128xf32>
      %c0_33 = arith.constant 0 : index
      %c0_34 = arith.constant 0 : index
      %67 = vector.load %arg8[%c0_33, %c0_34] : memref<8x128xf32, #tpu.memory_space<vmem>>, vector<8x128xf32>
      tpu.vector_store %arg8[%c0_33, %c0_34], %66 {strides = array<i32>} : memref<8x128xf32, #tpu.memory_space<vmem>>, vector<8x128xf32>,
      %c0_35 = arith.constant 0 : index
      %c0_36 = arith.constant 0 : index
      %68 = vector.load %arg9[%c0_35, %c0_36] : memref<8x128xf32, #tpu.memory_space<vmem>>, vector<8x128xf32>
      %69 = vector.shape_cast %47 : vector<16x128xf32> to vector<2x8x128xf32>
      %cst_37 = arith.constant dense<0xFF800000> : vector<8x128xf32>
      %70 = vector.multi_reduction <maximumf>, %69, %cst_37 [0] : vector<2x8x128xf32> to vector<8x128xf32>
      %71 = arith.maximumf %68, %70 : vector<8x128xf32>
      %c0_38 = arith.constant 0 : index
      %c0_39 = arith.constant 0 : index
      %72 = vector.load %arg9[%c0_38, %c0_39] : memref<8x128xf32, #tpu.memory_space<vmem>>, vector<8x128xf32>
      tpu.vector_store %arg9[%c0_38, %c0_39], %71 {strides = array<i32>} : memref<8x128xf32, #tpu.memory_space<vmem>>, vector<8x128xf32>,
      %c0_40 = arith.constant 0 : index
      %c0_41 = arith.constant 0 : index
      %73 = vector.load %arg9[%c0_40, %c0_41] : memref<8x128xf32, #tpu.memory_space<vmem>>, vector<8x128xf32>
      %74 = vector.shape_cast %73 : vector<8x128xf32> to vector<1x8x128xf32>
      %cst_42 = arith.constant dense<0xFF800000> : vector<1xf32>
      %75 = vector.multi_reduction <maximumf>, %74, %cst_42 [1, 2] : vector<1x8x128xf32> to vector<1xf32>
      %76 = vector.shape_cast %75 : vector<1xf32> to vector<1x1x1xf32>
      %77 = vector.extract %76[0, 0, 0] : f32 from vector<1x1x1xf32>
      %cst_43 = arith.constant 1.000000e+00 : f32
      %78 = arith.cmpf ogt, %77, %cst_43 : f32
      %c0_44 = arith.constant 0 : index
      %c0_45 = arith.constant 0 : index
      %79 = vector.load %arg7[%c0_44, %c0_45] : memref<8x128xf32, #tpu.memory_space<vmem>>, vector<8x128xf32>
      %80 = vector.shape_cast %79 : vector<8x128xf32> to vector<1x8x128xf32>
      %cst_46 = arith.constant dense<0.000000e+00> : vector<1xf32>
      %81 = vector.multi_reduction <add>, %80, %cst_46 [1, 2] : vector<1x8x128xf32> to vector<1xf32>
      %82 = vector.shape_cast %81 : vector<1xf32> to vector<1x1x1xf32>
      %83 = vector.extract %82[0, 0, 0] : f32 from vector<1x1x1xf32>
      %c0_47 = arith.constant 0 : index
      %c0_48 = arith.constant 0 : index
      %84 = vector.load %arg5[%c0_47, %c0_48] : memref<8x128xf32, #tpu.memory_space<vmem>>, vector<8x128xf32>
      %85 = vector.shape_cast %84 : vector<8x128xf32> to vector<1x8x128xf32>
      %cst_49 = arith.constant dense<0.000000e+00> : vector<1xf32>
      %86 = vector.multi_reduction <add>, %85, %cst_49 [1, 2] : vector<1x8x128xf32> to vector<1xf32>
      %87 = vector.shape_cast %86 : vector<1xf32> to vector<1x1x1xf32>
      %88 = vector.extract %87[0, 0, 0] : f32 from vector<1x1x1xf32>
      %89 = arith.select %78, %83, %88 : f32
      %c0_50 = arith.constant 0 : index
      %c0_51 = arith.constant 0 : index
      %90 = vector.load %arg8[%c0_50, %c0_51] : memref<8x128xf32, #tpu.memory_space<vmem>>, vector<8x128xf32>
      %91 = vector.shape_cast %90 : vector<8x128xf32> to vector<1x8x128xf32>
      %cst_52 = arith.constant dense<0.000000e+00> : vector<1xf32>
      %92 = vector.multi_reduction <add>, %91, %cst_52 [1, 2] : vector<1x8x128xf32> to vector<1xf32>
      %93 = vector.shape_cast %92 : vector<1xf32> to vector<1x1x1xf32>
      %94 = vector.extract %93[0, 0, 0] : f32 from vector<1x1x1xf32>
      %c0_53 = arith.constant 0 : index
      %c0_54 = arith.constant 0 : index
      %95 = vector.load %arg6[%c0_53, %c0_54] : memref<8x128xf32, #tpu.memory_space<vmem>>, vector<8x128xf32>
      %96 = vector.shape_cast %95 : vector<8x128xf32> to vector<1x8x128xf32>
      %cst_55 = arith.constant dense<0.000000e+00> : vector<1xf32>
      %97 = vector.multi_reduction <add>, %96, %cst_55 [1, 2] : vector<1x8x128xf32> to vector<1xf32>
      %98 = vector.shape_cast %97 : vector<1xf32> to vector<1x1x1xf32>
      %99 = vector.extract %98[0, 0, 0] : f32 from vector<1x1x1xf32>
      %100 = arith.select %78, %94, %99 : f32
      %cst_56 = arith.constant 1.000000e+00 : f32
      %101 = arith.addf %89, %cst_56 : f32
      %cst_57 = arith.constant 1.000000e+00 : f32
      %102 = arith.addf %100, %cst_57 : f32
      %103 = arith.divf %101, %102 : f32
      %cst_58 = arith.constant 1.000000e+00 : f32
      %104 = arith.subf %cst_58, %103 : f32
      %105 = vector.broadcast %104 : f32 to vector<1x1xf32>
      %c0_59 = arith.constant 0 : index
      %c0_60 = arith.constant 0 : index
      %106 = vector.load %arg4[%c0_59, %c0_60] : memref<1x1xf32, #tpu.memory_space<vmem>>, vector<1x1xf32>
      tpu.vector_store %arg4[%c0_59, %c0_60], %105 {strides = array<i32>} : memref<1x1xf32, #tpu.memory_space<vmem>>, vector<1x1xf32>,
    } else {
    }
    return
  }
  func.func @transform_0(%arg0: i32, %arg1: memref<1xi32, #tpu.memory_space<smem>>) -> (i32, i32) {
    %c0_i32 = arith.constant 0 : i32
    %c0_i32_0 = arith.constant 0 : i32
    return %arg0, %c0_i32 : i32, i32
  }
  func.func @transform_1(%arg0: i32, %arg1: memref<1xi32, #tpu.memory_space<smem>>) -> (i32, i32) {
    %c0_i32 = arith.constant 0 : i32
    %c0_i32_0 = arith.constant 0 : i32
    return %arg0, %c0_i32 : i32, i32
  }
  func.func @transform_2(%arg0: i32, %arg1: memref<1xi32, #tpu.memory_space<smem>>) -> (i32, i32) {
    %c0_i32 = arith.constant 0 : i32
    %c0_i32_0 = arith.constant 0 : i32
    %c0_i32_1 = arith.constant 0 : i32
    return %c0_i32, %c0_i32_0 : i32, i32
  }
}

</mosaic_0001>

<llo_original>
// kernel: tpu_custom_call.1
$region0: #{tpu_custom_call.1}
  #allocation0 [shape = 'u32[]', space=smem, size = 0x4, offset = 0x4, fixed_abs, tag = 'smem constant byte address 0x4 - core index']
  #allocation1 [shape = 'u32[144,128]{1,0:T(1,128)}', space=vmem, size = 0x12000, scoped, tag = 'internal scratch']
  #allocation2 [shape = 'f32[8,128]{1,0:T(8,128)}', space=vmem, size = 0x1000, scoped, tag = 'scratch operand']
  #allocation3 [shape = 'f32[8,128]{1,0:T(8,128)}', space=vmem, size = 0x1000, scoped, tag = 'scratch operand']
  #allocation4 [shape = 'f32[8,128]{1,0:T(8,128)}', space=vmem, size = 0x1000, scoped, tag = 'scratch operand']
  #allocation5 [shape = 'f32[8,128]{1,0:T(8,128)}', space=vmem, size = 0x1000, scoped, tag = 'scratch operand']
  #allocation6 [shape = 'f32[8,128]{1,0:T(8,128)}', space=vmem, size = 0x1000, scoped, tag = 'scratch operand']
  #allocation7 [shape = 's32[1]{0}', space=sflag, size = 0x4, scoped, tag = 'scoped memory for tpu_custom_call.1']
  #allocation8 [shape = 's32[1]{0:T(128)S(6)}', space=smem, size = 0x200, scoped, tag = 'prefetched SMEM operand 0']
  %s0 = inlined_call_operand.<no memory space> [shape: s32[1], index: 0, kind: input, shape index: {}]
  %s1 = inlined_call_operand.hbm [shape: f32[16,128], index: 1, kind: input, shape index: {}]
  %s2 = inlined_call_operand.hbm [shape: f32[16,128], index: 2, kind: input, shape index: {}]
  %s3 = inlined_call_operand.hbm [shape: f32[1,1], index: 3, kind: output, shape index: {}]
  %s4 = sld [smem:[#allocation0]]
  $region38: #{tpu_custom_call.1} parent=0
    _
  %s6 = ssub.s32 1, %s4
  %s7 = scalar_select 0, %s6, %s4
  %8 = sst [smem:[#allocation8]] %s0
  $region1: #{tpu_custom_call.1} parent=0
    #allocation9 [shape = 'u8[8192]{0}', space=vmem, size = 0x2000, scoped, tag = 'input window, operand 1, single buffered']
    #allocation10 [shape = 's32[1]{0}', space=sflag, size = 0x4, scoped, tag = 'scoped memory for tpu_custom_call.1']
    #allocation11 [shape = 's32[1]{0}', space=sflag, size = 0x4, scoped, tag = 'scoped memory for tpu_custom_call.1']
    #allocation12 [shape = 'u8[8192]{0}', space=vmem, size = 0x2000, scoped, tag = 'input window, operand 2, single buffered']
    #allocation13 [shape = 's32[1]{0}', space=sflag, size = 0x4, scoped, tag = 'scoped memory for tpu_custom_call.1']
    #allocation14 [shape = 'u8[512]{0}', space=vmem, size = 0x400, scoped, tag = 'output window, operand 0, single buffered']
    %9 = vsyncpa [#allocation10], 0
    %10 = vsyncpa [#allocation13], 0
    %11 = vsyncpa [#allocation11], 0
    // Predicated region
    $region2: #{tpu_custom_call.1} parent=1 // pred_check
      _
    $region3: #{tpu_custom_call.1} parent=1 // pred_check_branch
      %13 = sbr.rel (0) target = $region5
    $region4: #{tpu_custom_call.1} parent=1 // pred_region
      %s15 = ssub.s32 256, 256
      %16 = vsyncadd [#allocation10], %s15
      %s17 = sshll.u32 [#allocation9], 4
      %s18 = int_to_ptr.vmem [resolvable:$true] %s17
      %23 = dma.hbm_to_vmem [thread:$0]  %s1, 256, %s18, [#allocation10], 128, 128, 8
    $region5: #{tpu_custom_call.1} parent=1 // pred_fallthru
      _
    // Predicated region
    $region6: #{tpu_custom_call.1} parent=1 // pred_check
      _
    $region7: #{tpu_custom_call.1} parent=1 // pred_check_branch
      %25 = sbr.rel (0) target = $region9
    $region8: #{tpu_custom_call.1} parent=1 // pred_region
      %s27 = ssub.s32 256, 256
      %28 = vsyncadd [#allocation13], %s27
      %s29 = sshll.u32 [#allocation12], 4
      %s30 = int_to_ptr.vmem [resolvable:$true] %s29
      %35 = dma.hbm_to_vmem [thread:$0]  %s2, 256, %s30, [#allocation13], 128, 128, 8
    $region9: #{tpu_custom_call.1} parent=1 // pred_fallthru
      _
    // Predicated region
    $region10: #{tpu_custom_call.1} parent=1 // pred_check
      _
    $region11: #{tpu_custom_call.1} parent=1 // pred_check_branch
      %37 = sbr.rel (0) target = $region13
    $region12: #{tpu_custom_call.1} parent=1 // pred_region
      %38 = dma.done [#allocation10], 256
    $region13: #{tpu_custom_call.1} parent=1 // pred_fallthru
      _
    // Predicated region
    $region14: #{tpu_custom_call.1} parent=1 // pred_check
      _
    $region15: #{tpu_custom_call.1} parent=1 // pred_check_branch
      %40 = sbr.rel (0) target = $region17
    $region16: #{tpu_custom_call.1} parent=1 // pred_region
      %41 = dma.done [#allocation13], 256
    $region17: #{tpu_custom_call.1} parent=1 // pred_fallthru
      _
    %p42 = scmp.eq.s32.totalorder 0, 0
    // Predicated region
    $region18: #{tpu_custom_call.1} parent=1 // pred_check
      %p43 = pneg %p42
    $region19: #{tpu_custom_call.1} parent=1 // pred_check_branch
      %45 = sbr.rel (%p43) target = $region21
    $region20: #{tpu_custom_call.1} parent=1 // pred_region
      %46 = vst [vmem:[#allocation2] sm:$0xff] 0.0
      %47 = vst [vmem:[#allocation3] sm:$0xff] 0.0
      %48 = vst [vmem:[#allocation4] sm:$0xff] 0.0
      %49 = vst [vmem:[#allocation5] sm:$0xff] 0.0
      %50 = vst [vmem:[#allocation6] sm:$0xff] -inf
    $region21: #{tpu_custom_call.1} parent=1 // pred_fallthru
      _
    %v51 = vld [vmem:[#allocation9] sm:$0xff]
    %v52 = vld [vmem:[#allocation9 + $0x8] sm:$0xff]
    %v53 = vld [vmem:[#allocation12] sm:$0xff]
    %v54 = vld [vmem:[#allocation12 + $0x8] sm:$0xff]
    %p55 = scmp.lt.s32.totalorder 0, 0
    // Predicated region
    $region22: #{tpu_custom_call.1} parent=1 // pred_check
      %p56 = pneg %p55
    $region23: #{tpu_custom_call.1} parent=1 // pred_check_branch
      %58 = sbr.rel (%p56) target = $region25
    $region24: #{tpu_custom_call.1} parent=1 // pred_region
      %v59 = vmul.f32 %v51, %v53
      %v60 = vmul.f32 %v52, %v54
      %v61 = vadd.f32 %v51, %v53
      %v62 = vadd.f32 %v52, %v54
      %v63 = vsub.f32 %v61, %v59
      %v64 = vsub.f32 %v62, %v60
      %v65 = vxor.u32 %v51, 2147483648
      %v66 = vxor.u32 %v52, 2147483648
      %v67 = vmul.f32 %v65, 1.442695
      %v68 = vpow.pop %v67
      %v69 = vmul.f32 %v66, 1.442695
      %v70 = vpow.pop %v69
      %v71 = vadd.f32 %v68, 1.0
      %v72 = vadd.f32 %v70, 1.0
      %v73 = vrcp.pop %v71
      %v74 = vmul.f32 1.0, %v73
      %v75 = vrcp.pop %v72
      %v76 = vmul.f32 1.0, %v75
      %v77 = vxor.u32 %v53, 2147483648
      %v78 = vxor.u32 %v54, 2147483648
      %v79 = vmul.f32 %v77, 1.442695
      %v80 = vpow.pop %v79
      %v81 = vmul.f32 %v78, 1.442695
      %v82 = vpow.pop %v81
      %v83 = vadd.f32 %v80, 1.0
      %v84 = vadd.f32 %v82, 1.0
      %v85 = vrcp.pop %v83
      %v86 = vmul.f32 1.0, %v85
      %v87 = vrcp.pop %v84
      %v88 = vmul.f32 1.0, %v87
      %v89 = vmul.f32 %v74, %v86
      %v90 = vmul.f32 %v76, %v88
      %v91 = vadd.f32 %v74, %v86
      %v92 = vadd.f32 %v76, %v88
      %v93 = vsub.f32 %v91, %v89
      %v94 = vsub.f32 %v92, %v90
      %v95 = vld [vmem:[#allocation2] sm:$0xff]
      %v96 = vadd.f32 %v59, %v60
      %v97 = vadd.f32 %v95, %v96
      %98 = vst [vmem:[#allocation2] sm:$0xff] %v97
      %v99 = vld [vmem:[#allocation3] sm:$0xff]
      %v100 = vadd.f32 %v63, %v64
      %v101 = vadd.f32 %v99, %v100
      %102 = vst [vmem:[#allocation3] sm:$0xff] %v101
      %v103 = vld [vmem:[#allocation4] sm:$0xff]
      %v104 = vadd.f32 %v89, %v90
      %v105 = vadd.f32 %v103, %v104
      %106 = vst [vmem:[#allocation4] sm:$0xff] %v105
      %v107 = vld [vmem:[#allocation5] sm:$0xff]
      %v108 = vadd.f32 %v93, %v94
      %v109 = vadd.f32 %v107, %v108
      %110 = vst [vmem:[#allocation5] sm:$0xff] %v109
      %v111 = vld [vmem:[#allocation6] sm:$0xff]
      %v112 = vmax.f32 %v53, %v54
      %v113 = vmax.f32 %v111, %v112
      %114 = vst [vmem:[#allocation6] sm:$0xff] %v113
    $region25: #{tpu_custom_call.1} parent=1 // pred_fallthru
      _
    // Predicated region
    $region26: #{tpu_custom_call.1} parent=1 // pred_check
      %p115 = pneg %p42
    $region27: #{tpu_custom_call.1} parent=1 // pred_check_branch
      %117 = sbr.rel (%p115) target = $region29
    $region28: #{tpu_custom_call.1} parent=1 // pred_region
      %s118 = sld [smem:[#allocation8]]
      %v119 = vlaneseq
      %v120 = vshrl.u32 %v119, 7
      %v121 = vadd.s32 %v120, 8
      %v122 = vlaneseq
      %v123 = vand.u32 %v122, 127
      %s124 = smul.u32 0, 2048
      %v125 = vmul.u32 %v120, 128
      %v126 = vmul.u32 %v121, 128
      %v127 = vstv %s124
      %v128 = vadd.s32 %v127, %v125
      %v129 = vadd.s32 %v127, %v126
      %v130 = vadd.s32 %v128, %v123
      %v131 = vadd.s32 %v129, %v123
      %v132 = vstv %s118
      %vm133 = vcmp.lt.s32.totalorder %v130, %v132
      %vm134 = vcmp.lt.s32.totalorder %v131, %v132
      %v135 = vmul.f32 %v51, %v53
      %v136 = vmul.f32 %v52, %v54
      %v137 = vadd.f32 %v51, %v53
      %v138 = vadd.f32 %v52, %v54
      %v139 = vsub.f32 %v137, %v135
      %v140 = vsub.f32 %v138, %v136
      %v141 = vxor.u32 %v51, 2147483648
      %v142 = vxor.u32 %v52, 2147483648
      %v143 = vmul.f32 %v141, 1.442695
      %v144 = vpow.pop %v143
      %v145 = vmul.f32 %v142, 1.442695
      %v146 = vpow.pop %v145
      %v147 = vadd.f32 %v144, 1.0
      %v148 = vadd.f32 %v146, 1.0
      %v149 = vrcp.pop %v147
      %v150 = vmul.f32 1.0, %v149
      %v151 = vrcp.pop %v148
      %v152 = vmul.f32 1.0, %v151
      %v153 = vxor.u32 %v53, 2147483648
      %v154 = vxor.u32 %v54, 2147483648
      %v155 = vmul.f32 %v153, 1.442695
      %v156 = vpow.pop %v155
      %v157 = vmul.f32 %v154, 1.442695
      %v158 = vpow.pop %v157
      %v159 = vadd.f32 %v156, 1.0
      %v160 = vadd.f32 %v158, 1.0
      %v161 = vrcp.pop %v159
      %v162 = vmul.f32 1.0, %v161
      %v163 = vrcp.pop %v160
      %v164 = vmul.f32 1.0, %v163
      %v165 = vmul.f32 %v150, %v162
      %v166 = vmul.f32 %v152, %v164
      %v167 = vadd.f32 %v150, %v162
      %v168 = vadd.f32 %v152, %v164
      %v169 = vsub.f32 %v167, %v165
      %v170 = vsub.f32 %v168, %v166
      %v171 = vsel %vm133, %v135, 0.0
      %v172 = vsel %vm134, %v136, 0.0
      %v173 = vsel %vm133, %v139, 0.0
      %v174 = vsel %vm134, %v140, 0.0
      %v175 = vsel %vm133, %v165, 0.0
      %v176 = vsel %vm134, %v166, 0.0
      %v177 = vsel %vm133, %v169, 0.0
      %v178 = vsel %vm134, %v170, 0.0
      %v179 = vsel %vm133, %v53, -inf
      %v180 = vsel %vm134, %v54, -inf
      %v181 = vld [vmem:[#allocation2] sm:$0xff]
      %v182 = vadd.f32 %v171, %v172
      %v183 = vadd.f32 %v181, %v182
      %184 = vst [vmem:[#allocation2] sm:$0xff] %v183
      %v185 = vld [vmem:[#allocation3] sm:$0xff]
      %v186 = vadd.f32 %v173, %v174
      %v187 = vadd.f32 %v185, %v186
      %188 = vst [vmem:[#allocation3] sm:$0xff] %v187
      %v189 = vld [vmem:[#allocation4] sm:$0xff]
      %v190 = vadd.f32 %v175, %v176
      %v191 = vadd.f32 %v189, %v190
      %192 = vst [vmem:[#allocation4] sm:$0xff] %v191
      %v193 = vld [vmem:[#allocation5] sm:$0xff]
      %v194 = vadd.f32 %v177, %v178
      %v195 = vadd.f32 %v193, %v194
      %196 = vst [vmem:[#allocation5] sm:$0xff] %v195
      %v197 = vld [vmem:[#allocation6] sm:$0xff]
      %v198 = vmax.f32 %v179, %v180
      %v199 = vmax.f32 %v197, %v198
      %200 = vst [vmem:[#allocation6] sm:$0xff] %v199
      %v201 = vld [vmem:[#allocation6] sm:$0xff]
      %202 = vmax.xlane.f32.xlu0 %v201
      %v203 = vpop.xlane.xlu0 %202
      %v204 = vrot.slane %v203, 4
      %v205 = vmax.f32 %v203, %v204
      %v206 = vrot.slane %v205, 2
      %v207 = vmax.f32 %v205, %v206
      %v208 = vrot.slane %v207, 1
      %v209 = vmax.f32 %v207, %v208
      %s210 = vtos %v209
      %p211 = scmp.gt.f32.partialorder %s210, 1.0
      %v212 = vld [vmem:[#allocation4] sm:$0xff]
      %213 = vadd.xlane.f32.xlu0 %v212
      %v214 = vpop.xlane.xlu0 %213
      %v215 = vrot.slane %v214, 4
      %v216 = vadd.f32 %v214, %v215
      %v217 = vrot.slane %v216, 2
      %v218 = vadd.f32 %v216, %v217
      %v219 = vrot.slane %v218, 1
      %v220 = vadd.f32 %v218, %v219
      %s221 = vtos %v220
      %v222 = vld [vmem:[#allocation2] sm:$0xff]
      %223 = vadd.xlane.f32.xlu0 %v222
      %v224 = vpop.xlane.xlu0 %223
      %v225 = vrot.slane %v224, 4
      %v226 = vadd.f32 %v224, %v225
      %v227 = vrot.slane %v226, 2
      %v228 = vadd.f32 %v226, %v227
      %v229 = vrot.slane %v228, 1
      %v230 = vadd.f32 %v228, %v229
      %s231 = vtos %v230
      %s232 = scalar_select %p211, %s221, %s231
      %v233 = vld [vmem:[#allocation5] sm:$0xff]
      %234 = vadd.xlane.f32.xlu0 %v233
      %v235 = vpop.xlane.xlu0 %234
      %v236 = vrot.slane %v235, 4
      %v237 = vadd.f32 %v235, %v236
      %v238 = vrot.slane %v237, 2
      %v239 = vadd.f32 %v237, %v238
      %v240 = vrot.slane %v239, 1
      %v241 = vadd.f32 %v239, %v240
      %s242 = vtos %v241
      %v243 = vld [vmem:[#allocation3] sm:$0xff]
      %244 = vadd.xlane.f32.xlu0 %v243
      %v245 = vpop.xlane.xlu0 %244
      %v246 = vrot.slane %v245, 4
      %v247 = vadd.f32 %v245, %v246
      %v248 = vrot.slane %v247, 2
      %v249 = vadd.f32 %v247, %v248
      %v250 = vrot.slane %v249, 1
      %v251 = vadd.f32 %v249, %v250
      %s252 = vtos %v251
      %s253 = scalar_select %p211, %s242, %s252
      %s254 = sadd.f32 %s232, 1.0
      %s255 = sadd.f32 %s253, 1.0
      %v256 = vstv %s255
      %v257 = vrcp.pop %v256
      %s258 = vtos %v257
      %s259 = smul.f32 %s254, %s258
      %s260 = ssub.f32 1.0, %s259
      %v261 = vstv %s260
      %vm262 = vcmask 0
      %263 = vst.msk [vmem:[#allocation14] sm:$0x1] %vm262, %v261
    $region29: #{tpu_custom_call.1} parent=1 // pred_fallthru
      _
    // Predicated region
    $region30: #{tpu_custom_call.1} parent=1 // pred_check
      _
    $region31: #{tpu_custom_call.1} parent=1 // pred_check_branch
      %265 = sbr.rel (0) target = $region33
    $region32: #{tpu_custom_call.1} parent=1 // pred_region
      %s267 = ssub.s32 16, 16
      %268 = vsyncadd [#allocation11], %s267
      %s270 = sshll.u32 [#allocation14], 4
      %s271 = int_to_ptr.vmem [resolvable:$true] %s270
      %273 = dma.vmem_to_hbm [thread:$0]  %s271, 16, %s3, [#allocation11]
    $region33: #{tpu_custom_call.1} parent=1 // pred_fallthru
      _
    // Predicated region
    $region34: #{tpu_custom_call.1} parent=1 // pred_check
      _
    $region35: #{tpu_custom_call.1} parent=1 // pred_check_branch
      %275 = sbr.rel (0) target = $region37
    $region36: #{tpu_custom_call.1} parent=1 // pred_region
      %276 = dma.done [#allocation11], 16
    $region37: #{tpu_custom_call.1} parent=1 // pred_fallthru
      _
    %277 = vsyncpa [#allocation10], 1
    %278 = vsyncpa [#allocation13], 1
    %279 = vsyncpa [#allocation11], 1

</llo_original>
